<compile_context>
chip_gen: v6e
topology: v6e:2x2x1
jax: 0.10.0
libtpu: 0.0.40
codegen_flags: <defaults>
</compile_context>

<pallas_src>
import functools
import math

import jax
import jax.numpy as jnp
from jax import lax
from jax.experimental import pallas as pl
from jax.experimental.pallas import tpu as pltpu


_MIN_PALLAS_ELEMS = 100_000   # below this, plain XLA fusion wins
_SPLIT_BYTES = 4 << 20        # problems above this try to expose >=2 parallel tiles
_ACC_BYTES = 4 << 20          # cap on accumulator / output block size (bytes)


def _round_up(x, m):
    return (x + m - 1) // m * m


def _sublane_mult(dtype):
    """Packed sublane multiple: f32 -> 8, bf16/f16 -> 16, int8/fp8 -> 32."""
    return max(8, 32 // jnp.dtype(dtype).itemsize)


@functools.lru_cache(maxsize=None)
def _budgets():
    """(per-input-buffer tile byte budget, scoped vmem_limit_bytes)."""
    try:
        vmem = pltpu.get_tpu_info().vmem_capacity_bytes
    except Exception:
        vmem = None
    if vmem is None or vmem <= 80 * 1024 * 1024:
        # v7x-class (64 MiB VMEM per TC) or unknown: stay conservative.
        return 8 << 20, 40 << 20
    # v5e / v6e (128 MiB VMEM): bigger tiles, bigger scoped limit.
    return 16 << 20, 64 << 20


# --------------------------------------------------------------------------
# Kernel body (shared by the "lanes" and "middle" layouts).
# The tile's reduced axis is always axis 1; `r_axis` is the grid axis that
# walks the R tiles.  If no f32 scratch is supplied, the (f32) output block
# itself is the accumulator (it is resident across the R grid axis).
# --------------------------------------------------------------------------
def _mean_kernel(x_ref, o_ref, *acc_scratch, r_axis, valid_r, inv_r):
    acc_ref = acc_scratch[0] if acc_scratch else o_ref
    r = pl.program_id(r_axis)
    nr = pl.num_programs(r_axis)

    @pl.when(r == 0)
    def _init():
        acc_ref[...] = jnp.zeros_like(acc_ref)

    def _accumulate(mask_tail):
        x = x_ref[...].astype(jnp.float32)
        if mask_tail:
            # Final (partial) R tile: zero the out-of-range rows/lanes so the
            # divide-by-R below stays exact (OOB block reads are unspecified).
            ids = lax.broadcasted_iota(jnp.int32, x.shape, 1)
            x = jnp.where(ids < valid_r, x, 0.0)
        acc_ref[...] += jnp.sum(x, axis=1, keepdims=True)

    if valid_r is None:
        _accumulate(False)
    else:
        # Only the last R tile pays for the iota/compare/select mask.
        @pl.when(r < nr - 1)
        def _full_tile():
            _accumulate(False)

        @pl.when(r == nr - 1)
        def _tail_tile():
            _accumulate(True)

    @pl.when(r == nr - 1)
    def _finalize():
        if acc_scratch:
            o_ref[...] = (acc_ref[...] * inv_r).astype(o_ref.dtype)
        else:
            o_ref[...] = acc_ref[...] * inv_r


# --------------------------------------------------------------------------
# Wrappers.
# --------------------------------------------------------------------------
def _mean_reduce_lanes(x2, out_dtype):
    """x2: (K, R) -> (K, 1), mean over axis 1 (trailing reduced dims, no copy)."""
    K, R = x2.shape
    isz = x2.dtype.itemsize
    sub = _sublane_mult(x2.dtype)
    lane = 128
    budget, vmem_limit = _budgets()
    big = K * R * isz > _SPLIT_BYTES

    # Sublane (K) tile from budget (assuming at least one 128-lane R slab).
    kt = min(_round_up(K, sub), max(sub, (budget // (lane * isz)) // sub * sub))
    if big and pl.cdiv(K, kt) == 1 and K >= 2 * sub:
        kt = _round_up(pl.cdiv(K, 2), sub)          # >=2 parallel tiles (v7x megacore)
    # Lane (R) tile: prefer one exact full-R tile (no carry / no masking).
    if _round_up(R, lane) * kt * isz <= budget:
        rt, r_rem = R, 0
    else:
        rt = max(lane, (budget // (kt * isz)) // lane * lane)
        r_rem = R % rt

    grid = (pl.cdiv(K, kt), pl.cdiv(R, rt))
    kernel = functools.partial(_mean_kernel, r_axis=1,
                               valid_r=(r_rem or None), inv_r=1.0 / R)
    acc_into_out = jnp.dtype(out_dtype) == jnp.dtype(jnp.float32)
    scratch = [] if acc_into_out else [pltpu.VMEM((kt, 1), jnp.float32)]
    # TODO(synk): v7x micro-opt — keep a (kt, 128) lane-dense accumulator and do
    # the single cross-lane XLU reduce only in the finalize step.
    return pl.pallas_call(
        kernel,
        out_shape=jax.ShapeDtypeStruct((K, 1), out_dtype),
        grid_spec=pltpu.PrefetchScalarGridSpec(
            num_scalar_prefetch=0,
            grid=grid,
            in_specs=[pl.BlockSpec((kt, rt), lambda k, r: (k, r))],
            out_specs=pl.BlockSpec((kt, 1), lambda k, r: (k, 0)),
            scratch_shapes=scratch),
        compiler_params=pltpu.CompilerParams(
            dimension_semantics=("parallel", "arbitrary"),
            vmem_limit_bytes=vmem_limit),
        cost_estimate=pl.CostEstimate(
            flops=K * R, transcendentals=0,
            bytes_accessed=K * R * isz + K * jnp.dtype(out_dtype).itemsize),
    )(x2)


def _mean_reduce_mid(x3, out_dtype):
    """x3: (K1, R, K2) -> (K1, 1, K2), mean over axis 1 (lane-dense output)."""
    K1, R, K2 = x3.shape
    isz = x3.dtype.itemsize
    sub = _sublane_mult(x3.dtype)
    lane = 128
    budget, vmem_limit = _budgets()
    big = K1 * R * K2 * isz > _SPLIT_BYTES

    # Lane (K2) tile from budget (assuming at least one `sub`-row R slab).
    k2t = min(_round_up(K2, lane),
              max(lane, (budget // (sub * isz)) // lane * lane))
    if big and K1 == 1 and pl.cdiv(K2, k2t) == 1 and K2 >= 2 * lane:
        k2t = _round_up(pl.cdiv(K2, 2), lane)       # >=2 parallel tiles (v7x megacore)
    # Sublane (R) tile: prefer one exact full-R tile (no carry / no masking).
    if _round_up(R, sub) * k2t * isz <= budget:
        rt, r_rem = R, 0
    else:
        rt = max(sub, (budget // (k2t * isz)) // sub * sub)
        r_rem = R % rt
    # Leading (K1) tile: fill the budget, keep accumulator/output blocks small.
    r_bytes = _round_up(rt, sub) * k2t * isz
    k1t = max(1, min(K1, budget // max(1, r_bytes), _ACC_BYTES // (k2t * 4)))
    if big and K1 >= 2 and pl.cdiv(K1, k1t) * pl.cdiv(K2, k2t) == 1:
        k1t = pl.cdiv(K1, 2)

    grid = (pl.cdiv(K1, k1t), pl.cdiv(K2, k2t), pl.cdiv(R, rt))
    kernel = functools.partial(_mean_kernel, r_axis=2,
                               valid_r=(r_rem or None), inv_r=1.0 / R)
    acc_into_out = jnp.dtype(out_dtype) == jnp.dtype(jnp.float32)
    scratch = [] if acc_into_out else [pltpu.VMEM((k1t, 1, k2t), jnp.float32)]
    return pl.pallas_call(
        kernel,
        out_shape=jax.ShapeDtypeStruct((K1, 1, K2), out_dtype),
        grid_spec=pltpu.PrefetchScalarGridSpec(
            num_scalar_prefetch=0,
            grid=grid,
            in_specs=[pl.BlockSpec((k1t, rt, k2t), lambda i, j, r: (i, r, j))],
            out_specs=pl.BlockSpec((k1t, 1, k2t), lambda i, j, r: (i, 0, j)),
            scratch_shapes=scratch),
        compiler_params=pltpu.CompilerParams(
            dimension_semantics=("parallel", "parallel", "arbitrary"),
            vmem_limit_bytes=vmem_limit),
        cost_estimate=pl.CostEstimate(
            flops=K1 * R * K2, transcendentals=0,
            bytes_accessed=K1 * R * K2 * isz
                           + K1 * K2 * jnp.dtype(out_dtype).itemsize),
    )(x3)


# --------------------------------------------------------------------------
# Dispatch.
# --------------------------------------------------------------------------
def _normalize_dims(dim, rank):
    dims = (dim,) if isinstance(dim, int) else tuple(dim)
    dims = tuple(sorted(d % rank for d in dims))
    assert len(set(dims)) == len(dims), "duplicate reduction dims"
    return dims


def _contiguous_view(shape, red_dims):
    """(K1, R, K2) if the reduced dims form one contiguous block once size-1
    dims are ignored (i.e. the 3-D view is a pure reshape); else None."""
    red = set(red_dims)
    nontrivial = [d for d in range(len(shape)) if shape[d] > 1]
    nt_red = [d for d in nontrivial if d in red]
    if not nt_red:
        return None                      # R == 1; handled upstream
    pos = [nontrivial.index(d) for d in nt_red]
    if pos[-1] - pos[0] + 1 != len(pos):
        return None                      # reduced dims scattered between kept dims
    first, last = nt_red[0], nt_red[-1]
    K1 = math.prod(shape[:first])
    R = math.prod(shape[first:last + 1])
    K2 = math.prod(shape[last + 1:])
    return K1, R, K2


@functools.partial(jax.jit, static_argnames=("dim", "keepdim", "force_pallas"))
def mean_dim(x, dim=-1, keepdim=True, force_pallas=False):
    """Equivalent of torch.Tensor.mean(dim=dim, keepdim=keepdim)."""
    rank = x.ndim
    red_dims = _normalize_dims(dim, rank)
    kept_dims = tuple(d for d in range(rank) if d not in red_dims)
    kept_shape = tuple(x.shape[d] for d in kept_dims)

    R = math.prod(x.shape[d] for d in red_dims)
    K = math.prod(kept_shape)

    # torch.mean only supports floating dtypes; promote anything else to f32.
    if not jnp.issubdtype(x.dtype, jnp.floating):
        x = x.astype(jnp.float32)
    out_dtype = x.dtype

    # Degenerate / trivial / tiny problems: pallas_call fixed overhead dominates.
    if R == 0 or K == 0 or R == 1 or (K * R < _MIN_PALLAS_ELEMS and not force_pallas):
        return jnp.mean(x, axis=red_dims, keepdims=keepdim)

    view = _contiguous_view(x.shape, red_dims)
    if view is not None:
        K1, Rv, K2 = view
        if K2 == 1:
            # Trailing reduced dims: reduce over lanes, zero data movement.
            out_flat = _mean_reduce_lanes(x.reshape(K1, Rv), out_dtype).reshape(K)
        else:
            # Leading (K1 == 1) or middle reduced block: reduce over sublanes,
            # lane-dense output, zero data movement.
            out_flat = _mean_reduce_mid(x.reshape(K1, Rv, K2), out_dtype).reshape(K)
    else:
        # TODO(synk): truly scattered (non-contiguous) reduced dims still pay a
        # materialized HBM transpose; a multi-axis index_map kernel over the
        # original N-D array would remove the extra traffic.
        perm = red_dims + kept_dims
        xt = jnp.transpose(x, perm).reshape(1, R, K)
        out_flat = _mean_reduce_mid(xt, out_dtype).reshape(K)

    out = out_flat.reshape(kept_shape)
    if keepdim:
        out = out.reshape(tuple(1 if d in red_dims else x.shape[d]
                                for d in range(rank)))
    return out


# --------------------------------------------------------------------------
# Self-test.
# --------------------------------------------------------------------------
if __name__ == "__main__":
    key = jax.random.PRNGKey(0)

    # Small shapes mirroring MeanDim.test_data_suite (Pallas path forced so the
    # kernels themselves are validated on small / partial tiles).
    small_cases = [
        ((2, 4, 16, 16), (-2, -1), True),       # lanes
        ((7,), 0, True),                        # lanes, rank-1
        ((7, 3), (0, 1), True),                 # lanes, reduce-all
        ((5, 7, 3), (-3, -2, -1), False),       # lanes, reduce-all
        ((1, 5, 7, 3), 1, True),                # middle, K1 == 1
        ((1, 5, 7, 3), 2, True),                # middle, K1 > 1
        ((1, 5, 7, 3), (1, 3), False),          # scattered -> transpose fallback
        ((1, 5, 7, 3), (0, 1, 2, 3), True),     # lanes, reduce-all
        ((1, 1, 7, 3, 2), (1, 2), False),       # middle (size-1 dims ignored)
        ((1, 4, 7, 3, 2), 2, False),            # middle, K1 = 4
        ((1, 1, 1, 257), (0, 1, 2, 3), True),   # lanes, u55 regression shape
    ]
    # Larger shapes exercising the tiled grid, parallel-axis splitting, the
    # tail-tile masking, f32 accumulate-into-output, and bf16 scratch accum.
    big_cases = [
        ((256, 5000), 1, False, jnp.float32),          # lanes, K split into 2 tiles
        ((64, 150000), 1, False, jnp.float32),         # lanes, R tiled + tail mask
        ((5000, 384), 0, False, jnp.float32),          # middle K1=1, K2 split
        ((40000, 256), 0, False, jnp.float32),         # middle K1=1, R tiled + mask
        ((64, 33, 129), 1, False, jnp.bfloat16),       # middle K1>1, bf16 scratch acc
        ((8, 512, 1024), (1, 2), True, jnp.float32),   # lanes, large trailing R
    ]

    def check(idx, x, dim, keepdim, force):
        got = jax.block_until_ready(
            mean_dim(x, dim=dim, keepdim=keepdim, force_pallas=force))
        want = jnp.mean(x.astype(jnp.float32), axis=dim,
                        keepdims=keepdim).astype(x.dtype)
        if got.shape != want.shape:
            print(f"case {idx}: shape mismatch {got.shape} vs {want.shape}")
            return False
        if x.dtype == jnp.bfloat16:
            rtol, atol = 2e-2, 2e-2
        else:
            rtol, atol = 1e-4, 1e-4
        g32 = got.astype(jnp.float32)
        w32 = want.astype(jnp.float32)
        if not jnp.allclose(g32, w32, rtol=rtol, atol=atol):
            err = float(jnp.max(jnp.abs(g32 - w32)))
            print(f"case {idx}: value mismatch, max err {err}")
            return False
        return True

    ok = True
    idx = 0
    for shape, dim, keepdim in small_cases:
        key, sub = jax.random.split(key)
        x = jax.random.uniform(sub, shape, dtype=jnp.float32)
        ok &= check(idx, x, dim, keepdim, force=True)
        idx += 1
    for shape, dim, keepdim, dt in big_cases:
        key, sub = jax.random.split(key)
        x = jax.random.uniform(sub, shape, dtype=jnp.float32).astype(dt)
        ok &= check(idx, x, dim, keepdim, force=False)
        idx += 1

    if ok:
        print("KERNEL_OK")
</pallas_src>

<mosaic_0001>
module attributes {stable_mosaic.version = 11 : i64} {
  func.func @_mean_kernel(%arg0: i32, %arg1: i32, %arg2: memref<8x256xf32, #tpu.memory_space<vmem>>, %arg3: memref<8x1xf32, #tpu.memory_space<vmem>>) attributes {dimension_semantics = [#tpu.dimension_semantics<parallel>, #tpu.dimension_semantics<arbitrary>], iteration_bounds = array<i64: 1, 1>, scalar_prefetch = 0 : i64, scratch_operands = 0 : i64, tpu.core_type = #tpu.core_type<tc>, window_params = [{transform_indices = @transform_0, window_bounds = array<i64: 8, 256>}, {transform_indices = @transform_1, window_bounds = array<i64: 8, 1>}]} {
    %c0_i32 = arith.constant 0 : i32
    %0 = arith.cmpi eq, %arg1, %c0_i32 : i32
    %1 = arith.extui %0 : i1 to i32
    %c0_i32_0 = arith.constant 0 : i32
    %2 = arith.cmpi ne, %1, %c0_i32_0 : i32
    scf.if %2 {
      %cst_8 = arith.constant 0.000000e+00 : f32
      %12 = vector.broadcast %cst_8 : f32 to vector<8x1xf32>
      %c0_9 = arith.constant 0 : index
      %c0_10 = arith.constant 0 : index
      %13 = vector.load %arg3[%c0_9, %c0_10] : memref<8x1xf32, #tpu.memory_space<vmem>>, vector<8x1xf32>
      tpu.vector_store %arg3[%c0_9, %c0_10], %12 {strides = array<i32>} : memref<8x1xf32, #tpu.memory_space<vmem>>, vector<8x1xf32>,
    } else {
    }
    %c0 = arith.constant 0 : index
    %c0_1 = arith.constant 0 : index
    %3 = vector.load %arg2[%c0, %c0_1] : memref<8x256xf32, #tpu.memory_space<vmem>>, vector<8x256xf32>
    %c0_2 = arith.constant 0 : index
    %c0_3 = arith.constant 0 : index
    %4 = vector.load %arg3[%c0_2, %c0_3] : memref<8x1xf32, #tpu.memory_space<vmem>>, vector<8x1xf32>
    %cst = arith.constant dense<0.000000e+00> : vector<8xf32>
    %5 = vector.multi_reduction <add>, %3, %cst [1] : vector<8x256xf32> to vector<8xf32>
    %6 = vector.shape_cast %5 : vector<8xf32> to vector<8x1xf32>
    %7 = arith.addf %4, %6 : vector<8x1xf32>
    %c0_4 = arith.constant 0 : index
    %c0_5 = arith.constant 0 : index
    %8 = vector.load %arg3[%c0_4, %c0_5] : memref<8x1xf32, #tpu.memory_space<vmem>>, vector<8x1xf32>
    tpu.vector_store %arg3[%c0_4, %c0_5], %7 {strides = array<i32>} : memref<8x1xf32, #tpu.memory_space<vmem>>, vector<8x1xf32>,
    %c0_i32_6 = arith.constant 0 : i32
    %9 = arith.cmpi eq, %arg1, %c0_i32_6 : i32
    %10 = arith.extui %9 : i1 to i32
    %c0_i32_7 = arith.constant 0 : i32
    %11 = arith.cmpi ne, %10, %c0_i32_7 : i32
    scf.if %11 {
      %c0_8 = arith.constant 0 : index
      %c0_9 = arith.constant 0 : index
      %12 = vector.load %arg3[%c0_8, %c0_9] : memref<8x1xf32, #tpu.memory_space<vmem>>, vector<8x1xf32>
      %cst_10 = arith.constant 3.906250e-03 : f32
      %13 = vector.broadcast %cst_10 : f32 to vector<8x1xf32>
      %14 = arith.mulf %12, %13 : vector<8x1xf32>
      %c0_11 = arith.constant 0 : index
      %c0_12 = arith.constant 0 : index
      %15 = vector.load %arg3[%c0_11, %c0_12] : memref<8x1xf32, #tpu.memory_space<vmem>>, vector<8x1xf32>
      tpu.vector_store %arg3[%c0_11, %c0_12], %14 {strides = array<i32>} : memref<8x1xf32, #tpu.memory_space<vmem>>, vector<8x1xf32>,
    } else {
    }
    return
  }
  func.func @transform_0(%arg0: i32, %arg1: i32) -> (i32, i32) {
    %c0_i32 = arith.constant 0 : i32
    return %arg0, %arg1 : i32, i32
  }
  func.func @transform_1(%arg0: i32, %arg1: i32) -> (i32, i32) {
    %c0_i32 = arith.constant 0 : i32
    %c0_i32_0 = arith.constant 0 : i32
    return %arg0, %c0_i32 : i32, i32
  }
}

</mosaic_0001>

<llo_original>
// kernel: mean_dim.1
$region0: #{mean_dim.1}
  #allocation0 [shape = 'u32[]', space=smem, size = 0x4, offset = 0x4, fixed_abs, tag = 'smem constant byte address 0x4 - core index']
  #allocation1 [shape = 'u32[144,128]{1,0:T(1,128)}', space=vmem, size = 0x12000, scoped, tag = 'internal scratch']
  %s0 = inlined_call_operand.vmem [shape: f32[8,256], index: 0, kind: input, shape index: {}]
  %s1 = inlined_call_operand.vmem [shape: f32[8,1], index: 1, kind: output, shape index: {}]
  %s2 = sld [smem:[#allocation0]]
  $region22: #{mean_dim.1} parent=0
    _
  %s4 = ssub.s32 1, %s2
  %s5 = scalar_select 0, %s4, %s2
  // Predicated region
  $region2: #{mean_dim.1} parent=0 // pred_check
    _
  $region3: #{mean_dim.1} parent=0 // pred_check_branch
    %7 = sbr.rel (0) target = $region5
  $region4: #{mean_dim.1} parent=0 // pred_region
    _
  $region5: #{mean_dim.1} parent=0 // pred_fallthru
    _
  %p8 = scmp.eq.s32.totalorder 0, 0
  // Predicated region
  $region6: #{mean_dim.1} parent=0 // pred_check
    %p9 = pneg %p8
  $region7: #{mean_dim.1} parent=0 // pred_check_branch
    %11 = sbr.rel (%p9) target = $region9
  $region8: #{mean_dim.1} parent=0 // pred_region
    %vm12 = vcmask 7168
    %13 = vst.msk [vmem:[%s1] sm:$0xff] %vm12, 0.0
  $region9: #{mean_dim.1} parent=0 // pred_fallthru
    _
  %v14 = vld [vmem:[%s0] sm:$0xff]
  %v15 = vld [vmem:[%s0 + $0x8] sm:$0xff]
  %v16 = vld [vmem:[%s1] sm:$0xff]
  %v17 = vadd.f32 %v14, %v15
  %18 = vadd.xlane.f32.xlu0 %v17
  %v19 = vpop.xlane.xlu0 %18
  %v20 = vadd.f32 %v16, %v19
  %vm21 = vcmask 7168
  %22 = vst.msk [vmem:[%s1] sm:$0xff] %vm21, %v20
  // Predicated region
  $region10: #{mean_dim.1} parent=0 // pred_check
    %p23 = pneg %p8
  $region11: #{mean_dim.1} parent=0 // pred_check_branch
    %25 = sbr.rel (%p23) target = $region13
  $region12: #{mean_dim.1} parent=0 // pred_region
    %v26 = vld [vmem:[%s1] sm:$0xff]
    %v27 = vmul.f32 %v26, 0.00390625
    %28 = vst.msk [vmem:[%s1] sm:$0xff] %vm21, %v27
  $region13: #{mean_dim.1} parent=0 // pred_fallthru
    _
  // Predicated region
  $region14: #{mean_dim.1} parent=0 // pred_check
    _
  $region15: #{mean_dim.1} parent=0 // pred_check_branch
    %30 = sbr.rel (0) target = $region17
  $region16: #{mean_dim.1} parent=0 // pred_region
    _
  $region17: #{mean_dim.1} parent=0 // pred_fallthru
    _
  // Predicated region
  $region18: #{mean_dim.1} parent=0 // pred_check
    _
  $region19: #{mean_dim.1} parent=0 // pred_check_branch
    %32 = sbr.rel (0) target = $region21
  $region20: #{mean_dim.1} parent=0 // pred_region
    _
  $region21: #{mean_dim.1} parent=0 // pred_fallthru
    _

</llo_original>
